<compile_context>
chip_gen: v5e
topology: v5e:2x2
jax: 0.10.0
libtpu: 0.0.40
codegen_flags: <defaults>
</compile_context>

<pallas_src>
import functools
import math

import jax
import jax.numpy as jnp
from jax.experimental import pallas as pl
from jax.experimental.pallas import tpu as pltpu


# --------------------------------------------------------------------------
# Helpers
# --------------------------------------------------------------------------
def _round_up(x, m):
    return ((x + m - 1) // m) * m


def _pad_rows(x, target_rows):
    pad = target_rows - x.shape[0]
    if pad:
        x = jnp.pad(x, ((0, pad),) + ((0, 0),) * (x.ndim - 1))
    return x


# --------------------------------------------------------------------------
# Pallas kernels
# --------------------------------------------------------------------------
def _xw_kernel(x_ref, w_ref, o_ref):
    # XW = X @ W   (bf16 MXU operands, f32 accumulate, bf16 out for streaming).
    # Weights are pre-cast to bf16 at init; only X (streamed once) is cast here.
    o_ref[...] = jnp.dot(
        x_ref[...].astype(jnp.bfloat16),
        w_ref[...],
        preferred_element_type=jnp.float32,
    ).astype(o_ref.dtype)


def _gcn_aggregate_kernel(a_ref, xw_ref, b_ref, o_ref, acc_ref, *, tk):
    # Z = relu(A @ XW + b).  A is streamed in (tm, tk) tiles (K-reduction axis);
    # XW is fully VMEM-resident, sliced per K step.  f32 accumulator scratch is
    # kept (output is bf16, so accumulating directly into o_ref would round each
    # partial sum to bf16); bias + ReLU + bf16 cast happen in the finalize.
    k = pl.program_id(1)

    @pl.when(k == 0)
    def _():
        acc_ref[...] = jnp.zeros_like(acc_ref)

    start = pl.multiple_of(k * tk, 128)
    acc_ref[...] += jnp.dot(a_ref[...], xw_ref[pl.ds(start, tk), :],
                            preferred_element_type=jnp.float32)

    @pl.when(k == pl.num_programs(1) - 1)
    def _():
        z = acc_ref[...] + b_ref[...]                       # f32 epilogue
        o_ref[...] = jnp.maximum(z, 0.0).astype(o_ref.dtype)  # bf16 writeback


def _project_kernel(z_ref, w1_ref, b1_ref, w2_ref, b2_ref, o_ref):
    # out = ELU(z @ W1 + b1) @ W2 + b2  — GRACE projection head, row-tiled.
    # z and both weights arrive in bf16 (lane-dense); epilogues in f32.
    h = jnp.dot(z_ref[...], w1_ref[...],
                preferred_element_type=jnp.float32) + b1_ref[...]
    h = jnp.where(h > 0.0, h, jnp.expm1(h))                 # ELU(alpha=1), f32
    out = jnp.dot(h.astype(jnp.bfloat16), w2_ref[...],
                  preferred_element_type=jnp.float32) + b2_ref[...]
    o_ref[...] = out


# --------------------------------------------------------------------------
# pallas_call wrappers (grids, BlockSpecs, tiling)
# --------------------------------------------------------------------------
def linear_xw(x, w, *, rows_out=None, tm_target=512):
    """XW = X @ W, row-tiled; output bf16, already padded to `rows_out` rows so
    it feeds the aggregation kernel with no extra pad copy."""
    n, f = x.shape
    h = w.shape[1]
    if rows_out is None:
        rows_out = _round_up(n, 8)
    tm = math.gcd(tm_target, rows_out)          # divides rows_out, >= 8
    x_p = _pad_rows(x, rows_out)
    return pl.pallas_call(
        _xw_kernel,
        out_shape=jax.ShapeDtypeStruct((rows_out, h), jnp.bfloat16),
        grid=(rows_out // tm,),
        in_specs=[pl.BlockSpec((tm, f), lambda i: (i, 0)),
                  pl.BlockSpec((f, h), lambda i: (0, 0))],
        out_specs=pl.BlockSpec((tm, h), lambda i: (i, 0)),
        compiler_params=pltpu.CompilerParams(dimension_semantics=("parallel",)),
    )(x_p, w)


def gcn_aggregate(a, xw, b, *, tm, tk):
    """Z = relu(A @ XW + b).  A: [rows_p, cols_p] bf16 (pre-padded),
    XW: [cols_p, Hp] bf16 (VMEM-resident), b: [1, Hp] f32.  Output bf16."""
    rows_p, cols_p = a.shape
    h = xw.shape[1]
    kernel = functools.partial(_gcn_aggregate_kernel, tk=tk)
    # NOTE(v7x): with only one row tile the 'parallel' axis cannot feed both
    # TensorCores — fine for this tiny test, revisit for real graph sizes.
    return pl.pallas_call(
        kernel,
        out_shape=jax.ShapeDtypeStruct((rows_p, h), jnp.bfloat16),
        grid=(rows_p // tm, cols_p // tk),
        in_specs=[pl.BlockSpec((tm, tk), lambda i, k: (i, k)),
                  # Whole XW resident in VMEM; index never changes so it is
                  # DMA'd once (copies elided afterwards).
                  pl.BlockSpec((cols_p, h), lambda i, k: (0, 0)),
                  pl.BlockSpec((1, h), lambda i, k: (0, 0))],
        out_specs=pl.BlockSpec((tm, h), lambda i, k: (i, 0)),
        scratch_shapes=[pltpu.VMEM((tm, h), jnp.float32)],
        compiler_params=pltpu.CompilerParams(
            dimension_semantics=("parallel", "arbitrary"),
            vmem_limit_bytes=48 * 1024 * 1024),   # > v5e 16 MiB default, < v7x 64 MiB physical
    )(a, xw, b)


def projection_head(z, w1, b1, w2, b2, *, tm_target=512):
    """fc2(ELU(fc1(z))), fused and row-tiled; z and weights lane-dense bf16."""
    n, d = z.shape
    p = w1.shape[1]
    h = w2.shape[1]
    n_p = _round_up(n, 8)
    tm = math.gcd(tm_target, n_p)
    z_p = _pad_rows(z, n_p)
    out = pl.pallas_call(
        _project_kernel,
        out_shape=jax.ShapeDtypeStruct((n_p, h), jnp.float32),
        grid=(n_p // tm,),
        in_specs=[pl.BlockSpec((tm, d), lambda i: (i, 0)),
                  pl.BlockSpec((d, p), lambda i: (0, 0)),
                  pl.BlockSpec((1, p), lambda i: (0, 0)),
                  pl.BlockSpec((p, h), lambda i: (0, 0)),
                  pl.BlockSpec((1, h), lambda i: (0, 0))],
        out_specs=pl.BlockSpec((tm, h), lambda i: (i, 0)),
        compiler_params=pltpu.CompilerParams(dimension_semantics=("parallel",)),
    )(z_p, w1, b1, w2, b2)
    return out[:n] if n_p != n else out


# --------------------------------------------------------------------------
# Graph prep (XLA scatter-add, built directly at padded shape), params, module
# --------------------------------------------------------------------------
def build_norm_adj(edge_index, edge_weight, num_nodes, rows_p, cols_p,
                   dtype=jnp.bfloat16):
    """Dense GCN-normalized adjacency D^-1/2 (A + I) D^-1/2.

    Built with a scatter-add directly at the (rows_p, cols_p) padded shape the
    aggregation kernel expects (padded rows/cols are zero), stored in bf16
    (MXU-native, half the HBM/VMEM bytes for the dominant operand).
    """
    src, dst = edge_index[0], edge_index[1]
    if edge_weight is None:
        edge_weight = jnp.ones(src.shape[0], dtype=jnp.float32)
    w = edge_weight.astype(jnp.float32)

    deg = jax.ops.segment_sum(w, dst, num_segments=num_nodes) + 1.0   # + self-loop
    d_inv_sqrt = jnp.where(deg > 0.0, jax.lax.rsqrt(deg), 0.0)
    w_norm = w * d_inv_sqrt[dst] * d_inv_sqrt[src]

    a = jnp.zeros((rows_p, cols_p), jnp.float32)
    a = a.at[dst, src].add(w_norm)
    idx = jnp.arange(num_nodes, dtype=jnp.int32)
    a = a.at[idx, idx].add(d_inv_sqrt * d_inv_sqrt)                   # norm. self-loops
    return a.astype(dtype)


def _identity_aug(x, edge_index, edge_weight):
    return x, edge_index, edge_weight


class EncoderGRACE:
    """JAX/Pallas re-implementation of Encoder_GRACE (stand-in GCN encoder)."""

    LANE = 128   # do NOT pad to 256: aggregation is HBM-bound, wider adds bytes only

    def __init__(self, key, in_dim, hidden_dim, proj_dim=32):
        self.hidden_dim = hidden_dim
        self.proj_dim = proj_dim
        hp = _round_up(hidden_dim, self.LANE)   # lane-padded widths
        pp = _round_up(proj_dim, self.LANE)
        self._hp, self._pp = hp, pp

        k_ew, k_eb, k1w, k1b, k2w, k2b = jax.random.split(key, 6)

        def uinit(k, shape, scale):
            return jax.random.uniform(k, shape, minval=-scale, maxval=scale,
                                      dtype=jnp.float32)

        s_enc = in_dim ** -0.5
        s_fc1 = hidden_dim ** -0.5
        s_fc2 = proj_dim ** -0.5

        # Weights stored pre-transposed [in, out], zero-padded to 128-lane
        # widths (padded cols/rows contribute 0), and pre-cast to bf16 so the
        # kernels neither re-cast nor DMA f32 weight bytes.  Biases stay f32
        # (added in the f32 epilogues).
        w_enc = uinit(k_ew, (in_dim, hidden_dim), s_enc)
        b_enc = uinit(k_eb, (1, hidden_dim), s_enc)
        self.w_enc = jnp.pad(w_enc, ((0, 0), (0, hp - hidden_dim))).astype(jnp.bfloat16)
        self.b_enc = jnp.pad(b_enc, ((0, 0), (0, hp - hidden_dim)))

        w1 = uinit(k1w, (hidden_dim, proj_dim), s_fc1)
        b1 = uinit(k1b, (1, proj_dim), s_fc1)
        # w1 input rows padded hidden_dim -> hp so the lane-padded Z can be fed
        # directly (lane-dense loads, no slice copy between embedding & project).
        self.w1 = jnp.pad(w1, ((0, hp - hidden_dim),
                               (0, pp - proj_dim))).astype(jnp.bfloat16)
        self.b1 = jnp.pad(b1, ((0, 0), (0, pp - proj_dim)))

        w2 = uinit(k2w, (proj_dim, hidden_dim), s_fc2)
        b2 = uinit(k2b, (1, hidden_dim), s_fc2)
        self.w2 = jnp.pad(w2, ((0, pp - proj_dim),
                               (0, hp - hidden_dim))).astype(jnp.bfloat16)
        self.b2 = jnp.pad(b2, ((0, 0), (0, hp - hidden_dim)))

        self.augmentor = (_identity_aug, _identity_aug)

    def _embedding(self, x, edge_index, edge_weight):
        n = x.shape[0]
        # Large tiles (512 x 2048 A-tile = 2 MiB bf16, double-buffered 4 MiB)
        # clamped to the (padded) graph size; tk stays a multiple of 128.
        tm = min(512, _round_up(n, 8))
        tk = min(2048, _round_up(n, 128))
        rows_p = _round_up(n, tm)
        cols_p = _round_up(n, tk)

        a = build_norm_adj(edge_index, edge_weight, n, rows_p, cols_p)   # bf16
        # A @ (X @ W): compute the small XW once (already padded to cols_p rows),
        # then stream A row-tiles against the VMEM-resident XW.
        xw = linear_xw(x, self.w_enc, rows_out=cols_p)                   # bf16 [cols_p, Hp]
        z = gcn_aggregate(a, xw, self.b_enc, tm=tm, tk=tk)               # bf16 [rows_p, Hp]
        return z[:n] if rows_p != n else z                               # lane-padded Z

    def forward(self, x, edge_index, edge_weight=None):
        aug1, aug2 = self.augmentor
        x1, ei1, ew1 = aug1(x, edge_index, edge_weight)
        x2, ei2, ew2 = aug2(x, edge_index, edge_weight)
        # Identity stand-in augmentors => all three views are identical, so the
        # embedding is computed once and aliased (1x adjacency build / kernel run
        # instead of 3x).
        # TODO(synk): with real GRACE augmentors, stack the two augmented views
        #             along the row axis and run a single batched pallas_call.
        del x1, ei1, ew1, x2, ei2, ew2
        z_pad = self._embedding(x, edge_index, edge_weight)
        z = z_pad if self._hp == self.hidden_dim else z_pad[:, :self.hidden_dim]
        return z, z, z

    def project(self, z):
        hp = self._hp
        if z.shape[1] != hp:
            # Re-pad lanes only if the caller handed back a sliced Z (padded
            # w1 rows are zero, so results are unchanged).
            z = jnp.pad(z, ((0, 0), (0, hp - z.shape[1])))
        p = projection_head(z.astype(jnp.bfloat16),
                            self.w1, self.b1, self.w2, self.b2)
        return p[:, :self.hidden_dim]


# --------------------------------------------------------------------------
# Pure-JAX reference (f32 compute on the same bf16-stored weights)
# --------------------------------------------------------------------------
def _reference(x, edge_index, edge_weight, model):
    n = x.shape[0]
    src, dst = edge_index[0], edge_index[1]
    w = edge_weight if edge_weight is not None else jnp.ones(src.shape[0])
    a = jnp.zeros((n, n), jnp.float32).at[dst, src].add(w.astype(jnp.float32))
    a = a + jnp.eye(n, dtype=jnp.float32)
    deg = a.sum(axis=1)
    dis = jnp.where(deg > 0.0, 1.0 / jnp.sqrt(deg), 0.0)
    a = a * dis[:, None] * dis[None, :]
    H, P = model.hidden_dim, model.proj_dim
    w_enc = model.w_enc[:, :H].astype(jnp.float32)
    w1 = model.w1[:H, :P].astype(jnp.float32)
    w2 = model.w2[:P, :H].astype(jnp.float32)
    z = jnp.maximum(a @ x @ w_enc + model.b_enc[:, :H], 0.0)
    h = z @ w1 + model.b1[:, :P]
    h = jnp.where(h > 0.0, h, jnp.expm1(h))
    p = h @ w2 + model.b2[:, :H]
    return z, p


# --------------------------------------------------------------------------
# Main
# --------------------------------------------------------------------------
if __name__ == "__main__":
    key = jax.random.PRNGKey(0)
    k_param, k_x, k_edge, k_w = jax.random.split(key, 4)

    num_nodes = 16
    in_dim = 8
    hidden_dim = 128      # lane-aligned => fully lane-dense Z / projection path
    proj_dim = 32
    num_edges = 32

    x = jax.random.normal(k_x, (num_nodes, in_dim), dtype=jnp.float32)
    edge_index = jax.random.randint(k_edge, (2, num_edges), 0, num_nodes,
                                    dtype=jnp.int32)
    edge_weight = jax.random.uniform(k_w, (num_edges,), dtype=jnp.float32)

    model = EncoderGRACE(k_param, in_dim, hidden_dim, proj_dim)

    z, z1, z2 = model.forward(x, edge_index, edge_weight)
    p = model.project(z)
    jax.block_until_ready((z, z1, z2, p))

    assert z.shape == (num_nodes, hidden_dim)
    assert z1.shape == (num_nodes, hidden_dim)
    assert z2.shape == (num_nodes, hidden_dim)
    assert p.shape == (num_nodes, hidden_dim)

    z_ref, p_ref = _reference(x, edge_index, edge_weight, model)
    assert jnp.allclose(z.astype(jnp.float32), z_ref, atol=5e-2, rtol=5e-2), \
        "GCN embedding mismatch"
    assert jnp.allclose(p, p_ref, atol=5e-2, rtol=5e-2), "projection mismatch"

    print("KERNEL_OK")
</pallas_src>

<mosaic_0001>
module attributes {stable_mosaic.version = 11 : i64} {
  func.func @_xw_kernel(%arg0: i32, %arg1: memref<128x8xf32, #tpu.memory_space<vmem>>, %arg2: memref<8x128xbf16, #tpu.memory_space<vmem>>, %arg3: memref<128x128xbf16, #tpu.memory_space<vmem>>) attributes {dimension_semantics = [#tpu.dimension_semantics<parallel>], iteration_bounds = array<i64: 1>, scalar_prefetch = 0 : i64, scratch_operands = 0 : i64, tpu.core_type = #tpu.core_type<tc>, window_params = [{transform_indices = @transform_0, window_bounds = array<i64: 128, 8>}, {pipeline_mode = #tpu.pipeline_mode<synchronous>, transform_indices = @transform_1, window_bounds = array<i64: 8, 128>}, {transform_indices = @transform_2, window_bounds = array<i64: 128, 128>}]} {
    %c0 = arith.constant 0 : index
    %c0_0 = arith.constant 0 : index
    %0 = vector.load %arg1[%c0, %c0_0] : memref<128x8xf32, #tpu.memory_space<vmem>>, vector<128x8xf32>
    %1 = arith.truncf %0 : vector<128x8xf32> to vector<128x8xbf16>
    %c0_1 = arith.constant 0 : index
    %c0_2 = arith.constant 0 : index
    %2 = vector.load %arg2[%c0_1, %c0_2] : memref<8x128xbf16, #tpu.memory_space<vmem>>, vector<8x128xbf16>
    %cst = arith.constant dense<0.000000e+00> : vector<128x128xf32>
    %3 = tpu.matmul %1, %2, %cst {dimension_numbers = #tpu.dot_dimension_numbers<[1], [0], [0], [1], [0, 0, 1, 1], [], []>} : vector<128x8xbf16>, vector<8x128xbf16>, vector<128x128xf32> -> vector<128x128xf32>
    %4 = arith.truncf %3 : vector<128x128xf32> to vector<128x128xbf16>
    %c0_3 = arith.constant 0 : index
    %c0_4 = arith.constant 0 : index
    %5 = vector.load %arg3[%c0_3, %c0_4] : memref<128x128xbf16, #tpu.memory_space<vmem>>, vector<128x128xbf16>
    tpu.vector_store %arg3[%c0_3, %c0_4], %4 {strides = array<i32>} : memref<128x128xbf16, #tpu.memory_space<vmem>>, vector<128x128xbf16>,
    return
  }
  func.func @transform_0(%arg0: i32) -> (i32, i32) {
    %c0_i32 = arith.constant 0 : i32
    %c0_i32_0 = arith.constant 0 : i32
    return %arg0, %c0_i32 : i32, i32
  }
  func.func @transform_1(%arg0: i32) -> (i32, i32) {
    %c0_i32 = arith.constant 0 : i32
    %c0_i32_0 = arith.constant 0 : i32
    %c0_i32_1 = arith.constant 0 : i32
    return %c0_i32, %c0_i32_0 : i32, i32
  }
  func.func @transform_2(%arg0: i32) -> (i32, i32) {
    %c0_i32 = arith.constant 0 : i32
    %c0_i32_0 = arith.constant 0 : i32
    return %arg0, %c0_i32 : i32, i32
  }
}

</mosaic_0001>

<llo_original>
// kernel: tpu_custom_call.1
$region0: #{tpu_custom_call.1}
  #allocation0 [shape = 'u32[]', space=smem, size = 0x4, offset = 0x4, fixed_abs, tag = 'smem constant byte address 0x4 - core index']
  #allocation1 [shape = 'u32[72,128]{1,0:T(1,128)}', space=vmem, size = 0x9000, scoped, tag = 'internal scratch']
  %s0 = inlined_call_operand.vmem [shape: f32[128,8], index: 0, kind: input, shape index: {}]
  %s1 = inlined_call_operand.vmem [shape: bf16[8,128], index: 1, kind: input, shape index: {}]
  %s2 = inlined_call_operand.hbm [shape: bf16[128,128], index: 2, kind: output, shape index: {}]
  %s3 = sld [smem:[#allocation0]]
  $region18: #{tpu_custom_call.1} parent=0
    _
  %s5 = ssub.s32 1, %s3
  %s6 = scalar_select 0, %s5, %s3
  $region1: #{tpu_custom_call.1} parent=0
    #allocation2 [shape = 'u8[32768]{0}', space=vmem, size = 0x8000, scoped, tag = 'output window, operand 0, single buffered']
    #allocation3 [shape = 's32[1]{0}', space=sflag, size = 0x4, scoped, tag = 'scoped memory for tpu_custom_call.1']
    %7 = vsyncpa [#allocation3], 0
    // Predicated region
    $region2: #{tpu_custom_call.1} parent=1 // pred_check
      _
    $region3: #{tpu_custom_call.1} parent=1 // pred_check_branch
      %9 = sbr.rel (0) target = $region5
    $region4: #{tpu_custom_call.1} parent=1 // pred_region
      _
    $region5: #{tpu_custom_call.1} parent=1 // pred_fallthru
      _
    // Predicated region
    $region6: #{tpu_custom_call.1} parent=1 // pred_check
      _
    $region7: #{tpu_custom_call.1} parent=1 // pred_check_branch
      %11 = sbr.rel (0) target = $region9
    $region8: #{tpu_custom_call.1} parent=1 // pred_region
      _
    $region9: #{tpu_custom_call.1} parent=1 // pred_fallthru
      _
    %v13 = vld [vmem:[%s0] sm:$0xff]
    %v14 = vld [vmem:[%s0 + $0x8] sm:$0xff]
    %v15 = vld [vmem:[%s0 + $0x10] sm:$0xff]
    %v16 = vld [vmem:[%s0 + $0x18] sm:$0xff]
    %v17 = vld [vmem:[%s0 + $0x20] sm:$0xff]
    %v18 = vld [vmem:[%s0 + $0x28] sm:$0xff]
    %v19 = vld [vmem:[%s0 + $0x30] sm:$0xff]
    %v20 = vld [vmem:[%s0 + $0x38] sm:$0xff]
    %v21 = vld [vmem:[%s0 + $0x40] sm:$0xff]
    %v22 = vld [vmem:[%s0 + $0x48] sm:$0xff]
    %v23 = vld [vmem:[%s0 + $0x50] sm:$0xff]
    %v24 = vld [vmem:[%s0 + $0x58] sm:$0xff]
    %v25 = vld [vmem:[%s0 + $0x60] sm:$0xff]
    %v26 = vld [vmem:[%s0 + $0x68] sm:$0xff]
    %v27 = vld [vmem:[%s0 + $0x70] sm:$0xff]
    %v28 = vld [vmem:[%s0 + $0x78] sm:$0xff]
    %v29 = vpack.c.bf16 %v14, %v13
    %v30 = vpack.c.bf16 %v16, %v15
    %v31 = vpack.c.bf16 %v18, %v17
    %v32 = vpack.c.bf16 %v20, %v19
    %v33 = vpack.c.bf16 %v22, %v21
    %v34 = vpack.c.bf16 %v24, %v23
    %v35 = vpack.c.bf16 %v26, %v25
    %v36 = vpack.c.bf16 %v28, %v27
    %v37 = vld [vmem:[%s1] sm:$0xf]
    %vm38 = vcmask 64512
    %v40 = vsel %vm38, %v29, 0
    %v43 = vsel %vm38, %v30, 0
    %v46 = vsel %vm38, %v31, 0
    %v49 = vsel %vm38, %v32, 0
    %v52 = vsel %vm38, %v33, 0
    %v55 = vsel %vm38, %v34, 0
    %v58 = vsel %vm38, %v35, 0
    %v61 = vsel %vm38, %v36, 0
    %vm63 = vcmask 1043456
    %v65 = vsel %vm63, %v37, 0
    %67 = vmatpush.bf16.msra.mxu0 0
    %68 = vmatpush.bf16.msra.mxu0 0
    %69 = vmatpush.bf16.msra.mxu0 0
    %70 = vmatpush.bf16.msra.mxu0 0
    %71 = vmatpush.bf16.msra.mxu0 0
    %72 = vmatpush.bf16.msra.mxu0 0
    %73 = vmatpush.bf16.msra.mxu0 0
    %74 = vmatpush.bf16.msra.mxu0 %v65
    %75 = vmatmul.bf16.gmra.mxu0 %v40
    %v76 = vpop.f32.mrf.mxu0
    %v77 = vadd.f32 0.0, %v76
    %v78 = vpop.f32.mrf.mxu0
    %v79 = vadd.f32 0.0, %v78
    %80 = vmatmul.bf16.gmra.mxu0 %v43
    %v81 = vpop.f32.mrf.mxu0
    %v82 = vadd.f32 0.0, %v81
    %v83 = vpop.f32.mrf.mxu0
    %v84 = vadd.f32 0.0, %v83
    %85 = vmatmul.bf16.gmra.mxu0 %v46
    %v86 = vpop.f32.mrf.mxu0
    %v87 = vadd.f32 0.0, %v86
    %v88 = vpop.f32.mrf.mxu0
    %v89 = vadd.f32 0.0, %v88
    %90 = vmatmul.bf16.gmra.mxu0 %v49
    %v91 = vpop.f32.mrf.mxu0
    %v92 = vadd.f32 0.0, %v91
    %v93 = vpop.f32.mrf.mxu0
    %v94 = vadd.f32 0.0, %v93
    %95 = vmatmul.bf16.gmra.mxu0 %v52
    %v96 = vpop.f32.mrf.mxu0
    %v97 = vadd.f32 0.0, %v96
    %v98 = vpop.f32.mrf.mxu0
    %v99 = vadd.f32 0.0, %v98
    %100 = vmatmul.bf16.gmra.mxu0 %v55
    %v101 = vpop.f32.mrf.mxu0
    %v102 = vadd.f32 0.0, %v101
    %v103 = vpop.f32.mrf.mxu0
    %v104 = vadd.f32 0.0, %v103
    %105 = vmatmul.bf16.gmra.mxu0 %v58
    %v106 = vpop.f32.mrf.mxu0
    %v107 = vadd.f32 0.0, %v106
    %v108 = vpop.f32.mrf.mxu0
    %v109 = vadd.f32 0.0, %v108
    %110 = vmatmul.bf16.gmra.mxu0 %v61
    %v111 = vpop.f32.mrf.mxu0
    %v112 = vadd.f32 0.0, %v111
    %v113 = vpop.f32.mrf.mxu0
    %v114 = vadd.f32 0.0, %v113
    %115 = vdwg.mxu0
    %v116 = vpack.c.bf16 %v77, %v77
    %v117 = vpack.c.bf16 %v79, %v79
    %v118 = vpack.c.bf16 %v82, %v82
    %v119 = vpack.c.bf16 %v84, %v84
    %v120 = vpack.c.bf16 %v87, %v87
    %v121 = vpack.c.bf16 %v89, %v89
    %v122 = vpack.c.bf16 %v92, %v92
    %v123 = vpack.c.bf16 %v94, %v94
    %v124 = vpack.c.bf16 %v97, %v97
    %v125 = vpack.c.bf16 %v99, %v99
    %v126 = vpack.c.bf16 %v102, %v102
    %v127 = vpack.c.bf16 %v104, %v104
    %v128 = vpack.c.bf16 %v107, %v107
    %v129 = vpack.c.bf16 %v109, %v109
    %v130 = vpack.c.bf16 %v112, %v112
    %v131 = vpack.c.bf16 %v114, %v114
    %132 = vst [vmem:[#allocation2] sm:$0xf] %v116
    %133 = vst [vmem:[#allocation2 + $0x4] sm:$0xf] %v117
    %134 = vst [vmem:[#allocation2 + $0x8] sm:$0xf] %v118
    %135 = vst [vmem:[#allocation2 + $0xc] sm:$0xf] %v119
    %136 = vst [vmem:[#allocation2 + $0x10] sm:$0xf] %v120
    %137 = vst [vmem:[#allocation2 + $0x14] sm:$0xf] %v121
    %138 = vst [vmem:[#allocation2 + $0x18] sm:$0xf] %v122
    %139 = vst [vmem:[#allocation2 + $0x1c] sm:$0xf] %v123
    %140 = vst [vmem:[#allocation2 + $0x20] sm:$0xf] %v124
    %141 = vst [vmem:[#allocation2 + $0x24] sm:$0xf] %v125
    %142 = vst [vmem:[#allocation2 + $0x28] sm:$0xf] %v126
    %143 = vst [vmem:[#allocation2 + $0x2c] sm:$0xf] %v127
    %144 = vst [vmem:[#allocation2 + $0x30] sm:$0xf] %v128
    %145 = vst [vmem:[#allocation2 + $0x34] sm:$0xf] %v129
    %146 = vst [vmem:[#allocation2 + $0x38] sm:$0xf] %v130
    %147 = vst [vmem:[#allocation2 + $0x3c] sm:$0xf] %v131
    // Predicated region
    $region10: #{tpu_custom_call.1} parent=1 // pred_check
      _
    $region11: #{tpu_custom_call.1} parent=1 // pred_check_branch
      %149 = sbr.rel (0) target = $region13
    $region12: #{tpu_custom_call.1} parent=1 // pred_region
      %151 = vsyncadd [#allocation3], 0
      %s152 = sshll.u32 [#allocation2], 4
      %s153 = int_to_ptr.vmem [resolvable:$true] %s152
      %s154 = sshll.u32 %s2, 4
      %s155 = int_to_ptr.hbm [resolvable:$true] %s154
      %160 = dma.vmem_to_hbm [thread:$0]  %s153, 1024, %s155, [#allocation3], 64, 64, 4
    $region13: #{tpu_custom_call.1} parent=1 // pred_fallthru
      _
    // Predicated region
    $region14: #{tpu_custom_call.1} parent=1 // pred_check
      _
    $region15: #{tpu_custom_call.1} parent=1 // pred_check_branch
      %162 = sbr.rel (0) target = $region17
    $region16: #{tpu_custom_call.1} parent=1 // pred_region
      %164 = dma.done [#allocation3], 1024
    $region17: #{tpu_custom_call.1} parent=1 // pred_fallthru
      _
    %165 = vsyncpa [#allocation3], 1

</llo_original>
